<compile_context>
chip_gen: v7x
topology: tpu7x:2x2x1
jax: 0.10.0
libtpu: 0.0.40
codegen_flags: <defaults>
</compile_context>

<pallas_src>
import functools

import jax
import jax.numpy as jnp
from jax.experimental import pallas as pl
from jax.experimental.pallas import tpu as pltpu

_LANE = 128


def _round_up(x, m):
    return ((x + m - 1) // m) * m


def pack_head_params(w_heads, b_heads, lane_multiple=_LANE):
    """Pack per-head Linear params into one lane-dense weight/bias pair.

    W_all[h, n*out_dim + o] = w_heads[n, h, o], zero-padded on the lane axis to
    a multiple of `lane_multiple`.  Call ONCE at parameter-creation time so the
    transpose copy of the head weights is not paid on every forward call.
    """
    num_heads, hidden, out_dim = w_heads.shape
    n_all = num_heads * out_dim
    n_pad = _round_up(n_all, lane_multiple)
    w_all = jnp.transpose(w_heads, (1, 0, 2)).reshape(hidden, n_all)
    b_all = jnp.reshape(b_heads, (1, n_all)).astype(jnp.float32)
    if n_pad != n_all:
        w_all = jnp.pad(w_all, ((0, 0), (0, n_pad - n_all)))
        b_all = jnp.pad(b_all, ((0, 0), (0, n_pad - n_all)))
    return w_all, b_all


def _choose_batch_tile(batch, in_dim, hidden, n_pad, comp_bytes, out_bytes,
                       write_rep, vmem_budget, cap):
    """Largest multiple-of-8 batch tile that fits the VMEM budget."""
    # Single-buffered weights (Buffered(1)) + f32 biases.
    weights = (in_dim * hidden + hidden * n_pad) * comp_bytes + (hidden + n_pad) * 4
    rep_row = hidden * out_bytes if write_rep else 0
    # Double-buffered streaming operands: x tile in, rep/preds tiles out.
    per_row = 2 * (in_dim * comp_bytes + rep_row + n_pad * out_bytes)
    avail = max(vmem_budget - weights, per_row * 8)
    tm = (avail // per_row) // 8 * 8
    tm = max(8, min(int(tm), int(cap)))
    # Guarantee >= 2 grid steps for larger batches so the "parallel" batch axis
    # can shard across both TensorCores on v7x.
    if batch > 8:
        tm = min(tm, _round_up(-(-batch // 2), 8))
    tm = min(tm, _round_up(batch, 8))
    return int(tm)


def _mtl_body(x_ref, wb_ref, bb_ref, wall_ref, ball_ref):
    # Backbone: Linear + ReLU, f32 accumulation on the MXU; bias add / ReLU
    # stay in f32 (v5e has no bf16 VPU path).
    h = jnp.dot(x_ref[...], wb_ref[...], preferred_element_type=jnp.float32)
    h = jnp.maximum(h + bb_ref[...], 0.0)
    # All heads fused: one lane-dense matmul over [hidden, n_pad].
    p = jnp.dot(h.astype(wall_ref.dtype), wall_ref[...],
                preferred_element_type=jnp.float32)
    return h, p + ball_ref[...]


def _mtl_kernel_rep(x_ref, wb_ref, bb_ref, wall_ref, ball_ref,
                    rep_ref, preds_ref):
    h, p = _mtl_body(x_ref, wb_ref, bb_ref, wall_ref, ball_ref)
    rep_ref[...] = h.astype(rep_ref.dtype)
    preds_ref[...] = p.astype(preds_ref.dtype)


def _mtl_kernel_norep(x_ref, wb_ref, bb_ref, wall_ref, ball_ref, preds_ref):
    _, p = _mtl_body(x_ref, wb_ref, bb_ref, wall_ref, ball_ref)
    preds_ref[...] = p.astype(preds_ref.dtype)


@functools.partial(
    jax.jit,
    static_argnames=("num_heads", "out_dim", "block_batch", "compute_dtype",
                     "out_dtype", "write_rep", "vmem_limit_bytes"))
def vanilla_mtl_forward(x, w_backbone, b_backbone, w_all, b_all, *,
                        num_heads, out_dim,
                        block_batch=1024,
                        compute_dtype=jnp.float32,
                        out_dtype=jnp.float32,
                        write_rep=True,
                        vmem_limit_bytes=48 * 1024 * 1024):
    """Fused MTL forward.

    Returns (rep, preds) with rep: [batch, hidden] (or None if write_rep=False)
    and preds: [batch, num_heads, out_dim] (contiguous, no transpose needed).
    """
    batch, in_dim = x.shape
    hidden = w_backbone.shape[1]
    n_all = num_heads * out_dim
    n_pad = w_all.shape[1]          # lane-padded head width (multiple of 128)

    comp_bytes = int(jnp.dtype(compute_dtype).itemsize)
    out_bytes = int(jnp.dtype(out_dtype).itemsize)

    tm = _choose_batch_tile(batch, in_dim, hidden, n_pad, comp_bytes, out_bytes,
                            write_rep,
                            vmem_budget=int(vmem_limit_bytes * 3 // 4),
                            cap=block_batch)
    grid = (pl.cdiv(batch, tm),)

    x_c = x.astype(compute_dtype)
    wb_c = w_backbone.astype(compute_dtype)
    wall_c = w_all.astype(compute_dtype)
    bb_c = jnp.reshape(b_backbone, (1, hidden)).astype(jnp.float32)
    ball_c = jnp.reshape(b_all, (1, n_pad)).astype(jnp.float32)

    # Grid-invariant operands: index_map is constant, so double-buffering only
    # wastes VMEM -> single buffer.
    const = pl.Buffered(1)
    in_specs = [
        pl.BlockSpec((tm, in_dim), lambda i: (i, 0)),                       # x tile
        pl.BlockSpec((in_dim, hidden), lambda i: (0, 0), pipeline_mode=const),
        pl.BlockSpec((1, hidden), lambda i: (0, 0), pipeline_mode=const),
        pl.BlockSpec((hidden, n_pad), lambda i: (0, 0), pipeline_mode=const),
        pl.BlockSpec((1, n_pad), lambda i: (0, 0), pipeline_mode=const),
    ]
    preds_spec = pl.BlockSpec((tm, n_pad), lambda i: (i, 0))
    preds_shape = jax.ShapeDtypeStruct((batch, n_pad), out_dtype)

    flops = 2 * batch * (in_dim * hidden + hidden * n_pad)
    bytes_accessed = (batch * in_dim * comp_bytes
                      + (in_dim * hidden + hidden * n_pad) * comp_bytes
                      + (hidden + n_pad) * 4
                      + batch * n_pad * out_bytes
                      + (batch * hidden * out_bytes if write_rep else 0))
    cost = pl.CostEstimate(flops=int(flops), transcendentals=0,
                           bytes_accessed=int(bytes_accessed))
    cparams = pltpu.CompilerParams(
        dimension_semantics=("parallel",),          # batch tiles independent
        vmem_limit_bytes=int(vmem_limit_bytes))

    if write_rep:
        rep, preds_flat = pl.pallas_call(
            _mtl_kernel_rep,
            grid_spec=pltpu.PrefetchScalarGridSpec(
                num_scalar_prefetch=0,
                grid=grid,
                in_specs=in_specs,
                out_specs=[pl.BlockSpec((tm, hidden), lambda i: (i, 0)),
                           preds_spec]),
            out_shape=(jax.ShapeDtypeStruct((batch, hidden), out_dtype),
                       preds_shape),
            compiler_params=cparams,
            cost_estimate=cost,
        )(x_c, wb_c, bb_c, wall_c, ball_c)
    else:
        # Inference-only: skip the rep HBM write entirely.
        preds_flat = pl.pallas_call(
            _mtl_kernel_norep,
            grid_spec=pltpu.PrefetchScalarGridSpec(
                num_scalar_prefetch=0,
                grid=grid,
                in_specs=in_specs,
                out_specs=preds_spec),
            out_shape=preds_shape,
            compiler_params=cparams,
            cost_estimate=cost,
        )(x_c, wb_c, bb_c, wall_c, ball_c)
        rep = None

    # Slice the lane padding off; reshape (free) to a contiguous
    # [batch, num_heads, out_dim] view -- no HBM transpose round trip.
    preds = preds_flat[:, :n_all].reshape(batch, num_heads, out_dim)
    return rep, preds


def reference_forward(x, w_backbone, b_backbone, w_heads, b_heads):
    rep = jnp.maximum(x @ w_backbone + b_backbone, 0.0)
    preds = (jnp.einsum("bh,nho->bno", rep, w_heads)
             + jnp.transpose(b_heads, (1, 0, 2)))          # [batch, heads, out]
    return rep, preds


if __name__ == "__main__":
    # Small, MXU/vreg-friendly shapes.
    batch, in_dim, hidden, out_dim, num_heads = 8, 32, 128, 8, 3

    key = jax.random.PRNGKey(0)
    kx, kwb, kbb, kwh, kbh = jax.random.split(key, 5)

    x = jax.random.normal(kx, (batch, in_dim), dtype=jnp.float32)
    w_backbone = jax.random.normal(kwb, (in_dim, hidden), jnp.float32) * 0.1
    b_backbone = jax.random.normal(kbb, (1, hidden), jnp.float32) * 0.1
    w_heads = jax.random.normal(kwh, (num_heads, hidden, out_dim), jnp.float32) * 0.1
    b_heads = jax.random.normal(kbh, (num_heads, 1, out_dim), jnp.float32) * 0.1

    # Pack head params ONCE (parameter-creation time), lane-padded to 128.
    w_all, b_all = pack_head_params(w_heads, b_heads)

    # --- default f32 path (tight correctness check) ---
    rep, preds = vanilla_mtl_forward(x, w_backbone, b_backbone, w_all, b_all,
                                     num_heads=num_heads, out_dim=out_dim)
    jax.block_until_ready((rep, preds))

    rep_ref, preds_ref = reference_forward(x, w_backbone, b_backbone,
                                           w_heads, b_heads)
    assert jnp.allclose(rep, rep_ref, atol=1e-5, rtol=1e-5)
    assert jnp.allclose(preds, preds_ref, atol=1e-5, rtol=1e-5)
    # Per-head list view (matches the PyTorch module's list-of-preds output):
    for i in range(num_heads):
        assert jnp.allclose(preds[:, i, :],
                            rep_ref @ w_heads[i] + b_heads[i],
                            atol=1e-5, rtol=1e-5)

    # --- bf16 MXU + bf16 outputs path (v6e/v7x): looser tolerance ---
    rep_bf, preds_bf = vanilla_mtl_forward(
        x, w_backbone, b_backbone, w_all, b_all,
        num_heads=num_heads, out_dim=out_dim,
        compute_dtype=jnp.bfloat16, out_dtype=jnp.bfloat16)
    jax.block_until_ready((rep_bf, preds_bf))
    assert jnp.allclose(rep_bf.astype(jnp.float32), rep_ref, atol=3e-2, rtol=3e-2)
    assert jnp.allclose(preds_bf.astype(jnp.float32), preds_ref, atol=3e-2, rtol=3e-2)

    # --- inference-only path: skip the rep HBM write ---
    rep_none, preds_inf = vanilla_mtl_forward(
        x, w_backbone, b_backbone, w_all, b_all,
        num_heads=num_heads, out_dim=out_dim, write_rep=False)
    jax.block_until_ready(preds_inf)
    assert rep_none is None
    assert jnp.allclose(preds_inf, preds_ref, atol=1e-5, rtol=1e-5)

    # TODO(synk): VanillaMTL's detach/clone + register_hook and .backward()
    # gradient routing are autograd-only; they have no forward-pass Pallas
    # equivalent and forward values are unaffected.
    print("KERNEL_OK")
</pallas_src>

<mosaic_0001>
module attributes {stable_mosaic.version = 11 : i64} {
  func.func @_mtl_kernel_rep(%arg0: i32, %arg1: memref<8x32xf32, #tpu.memory_space<vmem>>, %arg2: memref<32x128xf32, #tpu.memory_space<vmem>>, %arg3: memref<1x128xf32, #tpu.memory_space<vmem>>, %arg4: memref<128x128xf32, #tpu.memory_space<vmem>>, %arg5: memref<1x128xf32, #tpu.memory_space<vmem>>, %arg6: memref<8x128xf32, #tpu.memory_space<vmem>>, %arg7: memref<8x128xf32, #tpu.memory_space<vmem>>) attributes {dimension_semantics = [#tpu.dimension_semantics<parallel>], iteration_bounds = array<i64: 1>, scalar_prefetch = 0 : i64, scratch_operands = 0 : i64, tpu.core_type = #tpu.core_type<tc>, window_params = [{transform_indices = @transform_0, window_bounds = array<i64: 8, 32>}, {pipeline_mode = #tpu.pipeline_mode<synchronous>, transform_indices = @transform_1, window_bounds = array<i64: 32, 128>}, {pipeline_mode = #tpu.pipeline_mode<synchronous>, transform_indices = @transform_2, window_bounds = array<i64: 1, 128>}, {pipeline_mode = #tpu.pipeline_mode<synchronous>, transform_indices = @transform_3, window_bounds = array<i64: 128, 128>}, {pipeline_mode = #tpu.pipeline_mode<synchronous>, transform_indices = @transform_4, window_bounds = array<i64: 1, 128>}, {transform_indices = @transform_5, window_bounds = array<i64: 8, 128>}, {transform_indices = @transform_6, window_bounds = array<i64: 8, 128>}]} {
    %c0 = arith.constant 0 : index
    %c0_0 = arith.constant 0 : index
    %0 = vector.load %arg1[%c0, %c0_0] : memref<8x32xf32, #tpu.memory_space<vmem>>, vector<8x32xf32>
    %c0_1 = arith.constant 0 : index
    %c0_2 = arith.constant 0 : index
    %1 = vector.load %arg2[%c0_1, %c0_2] : memref<32x128xf32, #tpu.memory_space<vmem>>, vector<32x128xf32>
    %cst = arith.constant dense<0.000000e+00> : vector<8x128xf32>
    %2 = tpu.matmul %0, %1, %cst {dimension_numbers = #tpu.dot_dimension_numbers<[1], [0], [0], [1], [0, 0, 1, 1], [], []>} : vector<8x32xf32>, vector<32x128xf32>, vector<8x128xf32> -> vector<8x128xf32>
    %c0_3 = arith.constant 0 : index
    %c0_4 = arith.constant 0 : index
    %3 = vector.load %arg3[%c0_3, %c0_4] : memref<1x128xf32, #tpu.memory_space<vmem>>, vector<1x128xf32>
    %4 = vector.broadcast %3 : vector<1x128xf32> to vector<8x128xf32>
    %5 = arith.addf %2, %4 : vector<8x128xf32>
    %cst_5 = arith.constant 0.000000e+00 : f32
    %6 = vector.broadcast %cst_5 : f32 to vector<8x128xf32>
    %7 = arith.maximumf %5, %6 : vector<8x128xf32>
    %c0_6 = arith.constant 0 : index
    %c0_7 = arith.constant 0 : index
    %8 = vector.load %arg4[%c0_6, %c0_7] : memref<128x128xf32, #tpu.memory_space<vmem>>, vector<128x128xf32>
    %cst_8 = arith.constant dense<0.000000e+00> : vector<8x128xf32>
    %9 = tpu.matmul %7, %8, %cst_8 {dimension_numbers = #tpu.dot_dimension_numbers<[1], [0], [0], [1], [0, 0, 1, 1], [], []>} : vector<8x128xf32>, vector<128x128xf32>, vector<8x128xf32> -> vector<8x128xf32>
    %c0_9 = arith.constant 0 : index
    %c0_10 = arith.constant 0 : index
    %10 = vector.load %arg5[%c0_9, %c0_10] : memref<1x128xf32, #tpu.memory_space<vmem>>, vector<1x128xf32>
    %11 = vector.broadcast %10 : vector<1x128xf32> to vector<8x128xf32>
    %12 = arith.addf %9, %11 : vector<8x128xf32>
    %c0_11 = arith.constant 0 : index
    %c0_12 = arith.constant 0 : index
    %13 = vector.load %arg6[%c0_11, %c0_12] : memref<8x128xf32, #tpu.memory_space<vmem>>, vector<8x128xf32>
    tpu.vector_store %arg6[%c0_11, %c0_12], %7 {strides = array<i32>} : memref<8x128xf32, #tpu.memory_space<vmem>>, vector<8x128xf32>,
    %c0_13 = arith.constant 0 : index
    %c0_14 = arith.constant 0 : index
    %14 = vector.load %arg7[%c0_13, %c0_14] : memref<8x128xf32, #tpu.memory_space<vmem>>, vector<8x128xf32>
    tpu.vector_store %arg7[%c0_13, %c0_14], %12 {strides = array<i32>} : memref<8x128xf32, #tpu.memory_space<vmem>>, vector<8x128xf32>,
    return
  }
  func.func @transform_0(%arg0: i32) -> (i32, i32) {
    %c0_i32 = arith.constant 0 : i32
    %c0_i32_0 = arith.constant 0 : i32
    return %arg0, %c0_i32 : i32, i32
  }
  func.func @transform_1(%arg0: i32) -> (i32, i32) {
    %c0_i32 = arith.constant 0 : i32
    %c0_i32_0 = arith.constant 0 : i32
    %c0_i32_1 = arith.constant 0 : i32
    return %c0_i32, %c0_i32_0 : i32, i32
  }
  func.func @transform_2(%arg0: i32) -> (i32, i32) {
    %c0_i32 = arith.constant 0 : i32
    %c0_i32_0 = arith.constant 0 : i32
    %c0_i32_1 = arith.constant 0 : i32
    return %c0_i32, %c0_i32_0 : i32, i32
  }
  func.func @transform_3(%arg0: i32) -> (i32, i32) {
    %c0_i32 = arith.constant 0 : i32
    %c0_i32_0 = arith.constant 0 : i32
    %c0_i32_1 = arith.constant 0 : i32
    return %c0_i32, %c0_i32_0 : i32, i32
  }
  func.func @transform_4(%arg0: i32) -> (i32, i32) {
    %c0_i32 = arith.constant 0 : i32
    %c0_i32_0 = arith.constant 0 : i32
    %c0_i32_1 = arith.constant 0 : i32
    return %c0_i32, %c0_i32_0 : i32, i32
  }
  func.func @transform_5(%arg0: i32) -> (i32, i32) {
    %c0_i32 = arith.constant 0 : i32
    %c0_i32_0 = arith.constant 0 : i32
    return %arg0, %c0_i32 : i32, i32
  }
  func.func @transform_6(%arg0: i32) -> (i32, i32) {
    %c0_i32 = arith.constant 0 : i32
    %c0_i32_0 = arith.constant 0 : i32
    return %arg0, %c0_i32 : i32, i32
  }
}

</mosaic_0001>

<llo_original>
// kernel: vanilla_mtl_forward.1
$region0: #{vanilla_mtl_forward.1}
  #allocation0 [shape = 'u32[]', space=smem, size = 0x4, offset = 0x4, fixed_abs, tag = 'smem constant byte address 0x4 - core index']
  #allocation1 [shape = 'u32[144,128]{1,0:T(1,128)}', space=vmem, size = 0x12000, scoped, tag = 'internal scratch']
  %s0 = inlined_call_operand.hbm [shape: f32[8,32], index: 0, kind: input, shape index: {}]
  %s1 = inlined_call_operand.hbm [shape: f32[32,128], index: 1, kind: input, shape index: {}]
  %s2 = inlined_call_operand.vmem [shape: f32[1,128], index: 2, kind: input, shape index: {}]
  %s3 = inlined_call_operand.hbm [shape: f32[128,128], index: 3, kind: input, shape index: {}]
  %s4 = inlined_call_operand.vmem [shape: f32[1,128], index: 4, kind: input, shape index: {}]
  %s5 = inlined_call_operand.hbm [shape: f32[8,128], index: 5, kind: output, shape index: {0}]
  %s6 = inlined_call_operand.vmem [shape: f32[8,128], index: 6, kind: output, shape index: {1}]
  %7 = xla_tuple %s5, %s6
  %s8 = sld [smem:[#allocation0]]
  $region50: #{vanilla_mtl_forward.1} parent=0
    _
  %s10 = ssub.s32 1, %s8
  %s11 = scalar_select 0, %s10, %s8
  $region1: #{vanilla_mtl_forward.1} parent=0
    #allocation2 [shape = 'u8[4096]{0}', space=vmem, size = 0x1000, scoped, tag = 'input window, operand 0, single buffered']
    #allocation3 [shape = 's32[1]{0}', space=sflag, size = 0x4, scoped, tag = 'scoped memory for vanilla_mtl_forward.1']
    #allocation4 [shape = 's32[1]{0}', space=sflag, size = 0x4, scoped, tag = 'scoped memory for vanilla_mtl_forward.1']
    #allocation5 [shape = 'u8[16384]{0}', space=vmem, size = 0x4000, scoped, tag = 'input window, operand 1, single buffered']
    #allocation6 [shape = 's32[1]{0}', space=sflag, size = 0x4, scoped, tag = 'scoped memory for vanilla_mtl_forward.1']
    #allocation7 [shape = 'u8[65536]{0}', space=vmem, size = 0x10000, scoped, tag = 'input window, operand 3, single buffered']
    #allocation8 [shape = 'u8[4096]{0}', space=vmem, size = 0x1000, scoped, tag = 'output window, operand 0, single buffered']
    %12 = vsyncpa [#allocation3], 0
    %13 = vsyncpa [#allocation6], 0
    %14 = vsyncpa [#allocation4], 0
    // Predicated region
    $region2: #{vanilla_mtl_forward.1} parent=1 // pred_check
      _
    $region3: #{vanilla_mtl_forward.1} parent=1 // pred_check_branch
      %16 = sbr.rel (0) target = $region5
    $region4: #{vanilla_mtl_forward.1} parent=1 // pred_region
      %s18 = ssub.s32 128, 128
      %19 = vsyncadd [#allocation3], %s18
      %s21 = sshll.u32 [#allocation2], 4
      %s22 = int_to_ptr.vmem [resolvable:$true] %s21
      %24 = dma.hbm_to_vmem [thread:$0]  %s0, 128, %s22, [#allocation3]
    $region5: #{vanilla_mtl_forward.1} parent=1 // pred_fallthru
      _
    // Predicated region
    $region6: #{vanilla_mtl_forward.1} parent=1 // pred_check
      _
    $region7: #{vanilla_mtl_forward.1} parent=1 // pred_check_branch
      %26 = sbr.rel (0) target = $region9
    $region8: #{vanilla_mtl_forward.1} parent=1 // pred_region
      %s28 = ssub.s32 512, 512
      %29 = vsyncadd [#allocation6], %s28
      %s30 = sshll.u32 [#allocation5], 4
      %s31 = int_to_ptr.vmem [resolvable:$true] %s30
      %36 = dma.hbm_to_vmem [thread:$0]  %s1, 512, %s31, [#allocation6], 128, 128, 8
    $region9: #{vanilla_mtl_forward.1} parent=1 // pred_fallthru
      _
    // Predicated region
    $region10: #{vanilla_mtl_forward.1} parent=1 // pred_check
      _
    $region11: #{vanilla_mtl_forward.1} parent=1 // pred_check_branch
      %38 = sbr.rel (0) target = $region13
    $region12: #{vanilla_mtl_forward.1} parent=1 // pred_region
      _
    $region13: #{vanilla_mtl_forward.1} parent=1 // pred_fallthru
      _
    // Predicated region
    $region14: #{vanilla_mtl_forward.1} parent=1 // pred_check
      _
    $region15: #{vanilla_mtl_forward.1} parent=1 // pred_check_branch
      %40 = sbr.rel (0) target = $region17
    $region16: #{vanilla_mtl_forward.1} parent=1 // pred_region
      %s42 = ssub.s32 2048, 2048
      %43 = vsyncadd [#allocation6], %s42
      %s44 = sshll.u32 [#allocation7], 4
      %s45 = int_to_ptr.vmem [resolvable:$true] %s44
      %50 = dma.hbm_to_vmem [thread:$0]  %s3, 2048, %s45, [#allocation6], 128, 128, 8
    $region17: #{vanilla_mtl_forward.1} parent=1 // pred_fallthru
      _
    // Predicated region
    $region18: #{vanilla_mtl_forward.1} parent=1 // pred_check
      _
    $region19: #{vanilla_mtl_forward.1} parent=1 // pred_check_branch
      %52 = sbr.rel (0) target = $region21
    $region20: #{vanilla_mtl_forward.1} parent=1 // pred_region
      _
    $region21: #{vanilla_mtl_forward.1} parent=1 // pred_fallthru
      _
    // Predicated region
    $region22: #{vanilla_mtl_forward.1} parent=1 // pred_check
      _
    $region23: #{vanilla_mtl_forward.1} parent=1 // pred_check_branch
      %54 = sbr.rel (0) target = $region25
    $region24: #{vanilla_mtl_forward.1} parent=1 // pred_region
      %55 = dma.done [#allocation3], 128
    $region25: #{vanilla_mtl_forward.1} parent=1 // pred_fallthru
      _
    // Predicated region
    $region26: #{vanilla_mtl_forward.1} parent=1 // pred_check
      _
    $region27: #{vanilla_mtl_forward.1} parent=1 // pred_check_branch
      %57 = sbr.rel (0) target = $region29
    $region28: #{vanilla_mtl_forward.1} parent=1 // pred_region
      %58 = dma.done [#allocation6], 512
    $region29: #{vanilla_mtl_forward.1} parent=1 // pred_fallthru
      _
    // Predicated region
    $region30: #{vanilla_mtl_forward.1} parent=1 // pred_check
      _
    $region31: #{vanilla_mtl_forward.1} parent=1 // pred_check_branch
      %60 = sbr.rel (0) target = $region33
    $region32: #{vanilla_mtl_forward.1} parent=1 // pred_region
      %61 = dma.done [#allocation6], 2048
    $region33: #{vanilla_mtl_forward.1} parent=1 // pred_fallthru
      _
    %v62 = vld [vmem:[#allocation2] sm:$0xff]
    %v63 = vld [vmem:[#allocation5] sm:$0xff]
    %v64 = vld [vmem:[#allocation5 + $0x8] sm:$0xff]
    %v65 = vld [vmem:[#allocation5 + $0x10] sm:$0xff]
    %v66 = vld [vmem:[#allocation5 + $0x18] sm:$0xff]
    %v67 = vld [vmem:[%s2] sm:$0x1]
    %v69 = vlaneseq
    %v70 = vshrl.u32 %v69, 7
    %v71 = vsub.s32 0, %v70
    %v72 = vrot.slane %v67, %v71
    %vm74 = vcmask 261120
    %v76 = vsel %vm74, %v62, 0
    %78 = vmatprep.subr.mxu0 0.0
    %79 = vmatpush1.msra.mxu0 %v63
    %80 = vmatprep.subr.mxu0 0.0
    %81 = vmatpush1.msra.mxu0 %v64
    %82 = vmatprep.subr.mxu0 0.0
    %83 = vmatpush1.msra.mxu0 %v65
    %84 = vmatprep.subr.mxu0 0.0
    %85 = vmatpush1.msra.mxu0 %v66
    %86 = vmatprep.subr.mxu0 0.0
    %87 = vmatpush1.msra.mxu0 0.0
    %88 = vmatprep.subr.mxu0 0.0
    %89 = vmatpush1.msra.mxu0 0.0
    %90 = vmatprep.subr.mxu0 0.0
    %91 = vmatpush1.msra.mxu0 0.0
    %92 = vmatprep.subr.mxu0 0.0
    %93 = vmatpush1.msra.mxu0 0.0
    %94 = vmatprep.subr.mxu0 0.0
    %95 = vmatpush1.msra.mxu0 0.0
    %96 = vmatprep.subr.mxu0 0.0
    %97 = vmatpush1.msra.mxu0 0.0
    %98 = vmatprep.subr.mxu0 0.0
    %99 = vmatpush1.msra.mxu0 0.0
    %100 = vmatprep.subr.mxu0 0.0
    %101 = vmatpush1.msra.mxu0 0.0
    %102 = vmatprep.subr.mxu0 0.0
    %103 = vmatpush1.msra.mxu0 0.0
    %104 = vmatprep.subr.mxu0 0.0
    %105 = vmatpush1.msra.mxu0 0.0
    %106 = vmatprep.subr.mxu0 0.0
    %107 = vmatpush1.msra.mxu0 0.0
    %108 = vmatprep.subr.mxu0 0.0
    %109 = vmatpush1.msra.mxu0 0.0
    %110 = vmatprep.subr.mxu0 0.0
    %111 = vmatpush1.msra.mxu0 0.0
    %112 = vmatprep.subr.mxu0 0.0
    %113 = vmatpush1.msra.mxu0 0.0
    %114 = vmatprep.subr.mxu0 0.0
    %115 = vmatpush1.msra.mxu0 0.0
    %116 = vmatprep.subr.mxu0 0.0
    %117 = vmatpush1.msra.mxu0 0.0
    %118 = vmatprep.subr.mxu0 0.0
    %119 = vmatpush1.msra.mxu0 0.0
    %120 = vmatprep.subr.mxu0 0.0
    %121 = vmatpush1.msra.mxu0 0.0
    %122 = vmatprep.subr.mxu0 0.0
    %123 = vmatpush1.msra.mxu0 0.0
    %124 = vmatprep.subr.mxu0 0.0
    %125 = vmatpush1.msra.mxu0 0.0
    %126 = vmatprep.subr.mxu0 0.0
    %127 = vmatpush1.msra.mxu0 0.0
    %128 = vmatprep.subr.mxu0 0.0
    %129 = vmatpush1.msra.mxu0 0.0
    %130 = vmatprep.subr.mxu0 0.0
    %131 = vmatpush1.msra.mxu0 0.0
    %132 = vmatprep.subr.mxu0 0.0
    %133 = vmatpush1.msra.mxu0 0.0
    %134 = vmatprep.subr.mxu0 0.0
    %135 = vmatpush1.msra.mxu0 0.0
    %136 = vmatprep.subr.mxu0 0.0
    %137 = vmatpush1.msra.mxu0 0.0
    %138 = vmatprep.subr.mxu0 0.0
    %139 = vmatpush1.msra.mxu0 0.0
    %140 = vmatprep.subr.mxu0 0.0
    %141 = vmatpush1.msra.mxu0 0.0
    %142 = vmatprep.mubr.f32.mxu0 0.0
    %143 = vmatmul.mubr.f32.gmra.mrb[0].mxu0 %v76
    %v144 = vpop.f32.mrb[0].mxu0
    %v145 = vadd.f32 %v72, %v144
    %v146 = vpop.f32.mrb[0].mxu0
    %147 = vdwg.mxu0
    %v148 = vmax.f32 %v145, 0.0
    %v149 = vld [vmem:[#allocation7] sm:$0xff]
    %v150 = vld [vmem:[#allocation7 + $0x8] sm:$0xff]
    %v151 = vld [vmem:[#allocation7 + $0x10] sm:$0xff]
    %v152 = vld [vmem:[#allocation7 + $0x18] sm:$0xff]
    %v153 = vld [vmem:[#allocation7 + $0x20] sm:$0xff]
    %v154 = vld [vmem:[#allocation7 + $0x28] sm:$0xff]
    %v155 = vld [vmem:[#allocation7 + $0x30] sm:$0xff]
    %v156 = vld [vmem:[#allocation7 + $0x38] sm:$0xff]
    %v157 = vld [vmem:[#allocation7 + $0x40] sm:$0xff]
    %v158 = vld [vmem:[#allocation7 + $0x48] sm:$0xff]
    %v159 = vld [vmem:[#allocation7 + $0x50] sm:$0xff]
    %v160 = vld [vmem:[#allocation7 + $0x58] sm:$0xff]
    %v161 = vld [vmem:[#allocation7 + $0x60] sm:$0xff]
    %v162 = vld [vmem:[#allocation7 + $0x68] sm:$0xff]
    %v163 = vld [vmem:[#allocation7 + $0x70] sm:$0xff]
    %v164 = vld [vmem:[#allocation7 + $0x78] sm:$0xff]
    %v165 = vld [vmem:[%s4] sm:$0x1]
    %v167 = vlaneseq
    %v168 = vshrl.u32 %v167, 7
    %v169 = vsub.s32 0, %v168
    %v170 = vrot.slane %v165, %v169
    %172 = vmatprep.subr.mxu0 0.0
    %173 = vmatpush1.msra.mxu0 %v149
    %174 = vmatprep.subr.mxu0 0.0
    %175 = vmatpush1.msra.mxu0 %v150
    %176 = vmatprep.subr.mxu0 0.0
    %177 = vmatpush1.msra.mxu0 %v151
    %178 = vmatprep.subr.mxu0 0.0
    %179 = vmatpush1.msra.mxu0 %v152
    %180 = vmatprep.subr.mxu0 0.0
    %181 = vmatpush1.msra.mxu0 %v153
    %182 = vmatprep.subr.mxu0 0.0
    %183 = vmatpush1.msra.mxu0 %v154
    %184 = vmatprep.subr.mxu0 0.0
    %185 = vmatpush1.msra.mxu0 %v155
    %186 = vmatprep.subr.mxu0 0.0
    %187 = vmatpush1.msra.mxu0 %v156
    %188 = vmatprep.subr.mxu0 0.0
    %189 = vmatpush1.msra.mxu0 %v157
    %190 = vmatprep.subr.mxu0 0.0
    %191 = vmatpush1.msra.mxu0 %v158
    %192 = vmatprep.subr.mxu0 0.0
    %193 = vmatpush1.msra.mxu0 %v159
    %194 = vmatprep.subr.mxu0 0.0
    %195 = vmatpush1.msra.mxu0 %v160
    %196 = vmatprep.subr.mxu0 0.0
    %197 = vmatpush1.msra.mxu0 %v161
    %198 = vmatprep.subr.mxu0 0.0
    %199 = vmatpush1.msra.mxu0 %v162
    %200 = vmatprep.subr.mxu0 0.0
    %201 = vmatpush1.msra.mxu0 %v163
    %202 = vmatprep.subr.mxu0 0.0
    %203 = vmatpush1.msra.mxu0 %v164
    %204 = vmatprep.subr.mxu0 0.0
    %205 = vmatpush1.msra.mxu0 0.0
    %206 = vmatprep.subr.mxu0 0.0
    %207 = vmatpush1.msra.mxu0 0.0
    %208 = vmatprep.subr.mxu0 0.0
    %209 = vmatpush1.msra.mxu0 0.0
    %210 = vmatprep.subr.mxu0 0.0
    %211 = vmatpush1.msra.mxu0 0.0
    %212 = vmatprep.subr.mxu0 0.0
    %213 = vmatpush1.msra.mxu0 0.0
    %214 = vmatprep.subr.mxu0 0.0
    %215 = vmatpush1.msra.mxu0 0.0
    %216 = vmatprep.subr.mxu0 0.0
    %217 = vmatpush1.msra.mxu0 0.0
    %218 = vmatprep.subr.mxu0 0.0
    %219 = vmatpush1.msra.mxu0 0.0
    %220 = vmatprep.subr.mxu0 0.0
    %221 = vmatpush1.msra.mxu0 0.0
    %222 = vmatprep.subr.mxu0 0.0
    %223 = vmatpush1.msra.mxu0 0.0
    %224 = vmatprep.subr.mxu0 0.0
    %225 = vmatpush1.msra.mxu0 0.0
    %226 = vmatprep.subr.mxu0 0.0
    %227 = vmatpush1.msra.mxu0 0.0
    %228 = vmatprep.subr.mxu0 0.0
    %229 = vmatpush1.msra.mxu0 0.0
    %230 = vmatprep.subr.mxu0 0.0
    %231 = vmatpush1.msra.mxu0 0.0
    %232 = vmatprep.subr.mxu0 0.0
    %233 = vmatpush1.msra.mxu0 0.0
    %234 = vmatprep.subr.mxu0 0.0
    %235 = vmatpush1.msra.mxu0 0.0
    %236 = vmatprep.mubr.f32.mxu0 0.0
    %237 = vmatmul.mubr.f32.gmra.mrb[0].mxu0 %v148
    %v238 = vpop.f32.mrb[0].mxu0
    %v239 = vadd.f32 %v170, %v238
    %v240 = vpop.f32.mrb[0].mxu0
    %241 = vdwg.mxu0
    %242 = vst [vmem:[#allocation8] sm:$0xff] %v148
    %243 = vst [vmem:[%s6] sm:$0xff] %v239
    // Predicated region
    $region34: #{vanilla_mtl_forward.1} parent=1 // pred_check
      _
    $region35: #{vanilla_mtl_forward.1} parent=1 // pred_check_branch
      %245 = sbr.rel (0) target = $region37
    $region36: #{vanilla_mtl_forward.1} parent=1 // pred_region
      %s247 = ssub.s32 128, 128
      %248 = vsyncadd [#allocation4], %s247
      %s250 = sshll.u32 [#allocation8], 4
      %s251 = int_to_ptr.vmem [resolvable:$true] %s250
      %253 = dma.vmem_to_hbm [thread:$0]  %s251, 128, %s5, [#allocation4]
    $region37: #{vanilla_mtl_forward.1} parent=1 // pred_fallthru
      _
    // Predicated region
    $region38: #{vanilla_mtl_forward.1} parent=1 // pred_check
      _
    $region39: #{vanilla_mtl_forward.1} parent=1 // pred_check_branch
      %255 = sbr.rel (0) target = $region41
    $region40: #{vanilla_mtl_forward.1} parent=1 // pred_region
      _
    $region41: #{vanilla_mtl_forward.1} parent=1 // pred_fallthru
      _
    // Predicated region
    $region42: #{vanilla_mtl_forward.1} parent=1 // pred_check
      _
    $region43: #{vanilla_mtl_forward.1} parent=1 // pred_check_branch
      %257 = sbr.rel (0) target = $region45
    $region44: #{vanilla_mtl_forward.1} parent=1 // pred_region
      %258 = dma.done [#allocation4], 128
    $region45: #{vanilla_mtl_forward.1} parent=1 // pred_fallthru
      _
    // Predicated region
    $region46: #{vanilla_mtl_forward.1} parent=1 // pred_check
      _
    $region47: #{vanilla_mtl_forward.1} parent=1 // pred_check_branch
      %260 = sbr.rel (0) target = $region49
    $region48: #{vanilla_mtl_forward.1} parent=1 // pred_region
      _
    $region49: #{vanilla_mtl_forward.1} parent=1 // pred_fallthru
      _
    %261 = vsyncpa [#allocation3], 1
    %262 = vsyncpa [#allocation6], 1
    %263 = vsyncpa [#allocation4], 1

</llo_original>
